<compile_context>
chip_gen: v7x
topology: tpu7x:2x2x1
jax: 0.10.0
libtpu: 0.0.40
codegen_flags: <defaults>
</compile_context>

<pallas_src>
import functools
import math

import jax
import jax.numpy as jnp
from jax.experimental import pallas as pl
from jax.experimental.pallas import tpu as pltpu


# ---------------------------------------------------------------------------
# Frequency initializers (deterministic, plain JAX — parameter setup / glue)
# ---------------------------------------------------------------------------
def get_freqs_poslin(L: int, max_period: int = 10000) -> jnp.ndarray:
    half = L // 2
    return jnp.exp(
        -math.log(max_period) * jnp.arange(half, dtype=jnp.float32) / half
    )


def get_freqs_power_ls(L: int) -> jnp.ndarray:
    return 2.0 ** jnp.arange(L // 2, dtype=jnp.float32)


def get_freqs_power_nls(L: int) -> jnp.ndarray:
    return jnp.linspace(1.0, 2.0 ** (L // 2 - 1), L // 2, dtype=jnp.float32)


def get_freq_linear(L: int) -> jnp.ndarray:
    return jnp.arange(L // 2, dtype=jnp.float32)


def get_freq_gaussian(L: int, key=None) -> jnp.ndarray:
    # torch.normal(mean=0.0, std=0.01) — deterministic here via a fixed PRNGKey
    # (initialization parity with a torch-initialized module is not bit-exact).
    if key is None:
        key = jax.random.PRNGKey(42)
    return (0.01 * jax.random.normal(key, (L // 2,))).astype(jnp.float32)


# ---------------------------------------------------------------------------
# Pallas kernel — lane-dense layout, batch on lanes
# ---------------------------------------------------------------------------
def _pos_emb_kernel(x_ref, freqs2_ref, phase_ref, out_ref, *, include_x: bool):
    # x_ref:      (1, TB)  f32   batch on the lane axis (dense load)
    # freqs2_ref: (2F, 1)  f32   [freqs; freqs], VMEM-resident across grid steps
    # phase_ref:  (2F, 1)  f32   [0; -pi/2]  ->  cos(arg + phase) = [cos | sin]
    # out_ref:    (R, TB)        rows = [x?] + F cos rows + F sin rows
    x = x_ref[...]                                     # (1, TB)
    args = freqs2_ref[...] * x + phase_ref[...]        # (2F, TB) broadcast FMA (VPU)
    enc = jnp.cos(args)                                # (2F, TB) single EUP pass
    if include_x:
        out_ref[0:1, :] = x.astype(out_ref.dtype)
        out_ref[1:, :] = enc.astype(out_ref.dtype)     # single contiguous store
    else:
        out_ref[...] = enc.astype(out_ref.dtype)       # single aligned full-block store


def _choose_batch_tile(B: int, R: int, *, budget_bytes: int = 12 << 20,
                       min_steps: int = 4) -> int:
    """Lane-tile of the batch axis.

    Sized from the output row count R and a VMEM byte budget (double-buffered
    x + out blocks), and capped so that large batches get at least `min_steps`
    grid steps (v7x megacore sharding + DMA/compute overlap).  Returns B itself
    when one full-extent block suffices (also covers B not a multiple of 128).
    """
    per_lane_bytes = 4 * (R + 1) * 2                      # (x row + R rows) x 2 buffers
    tb_budget = max(128, (budget_bytes // per_lane_bytes) // 128 * 128)
    tb_split = max(128, ((B + min_steps - 1) // min_steps) // 128 * 128)
    tb = min(tb_budget, tb_split)
    if tb >= B:
        return B
    return tb


def positional_embedding_pallas(
    x: jnp.ndarray,
    freqs: jnp.ndarray,
    include_original: bool = False,
    *,
    out_dtype=jnp.float32,
    transposed_output: bool = False,
) -> jnp.ndarray:
    """x: (B, 1) or (B,); freqs: (F,) -> (B, R), R = 2F (+1 if include_original).

    Column order matches torch: [x (optional), cos(x*f), sin(x*f)].
    transposed_output=True returns the kernel-native (R, B) layout (no transpose
    pass); with the default layout, jit this with the consumer so XLA folds .T.
    """
    B = x.shape[0]
    F = freqs.shape[0]
    R = 2 * F + (1 if include_original else 0)
    out_dtype = jnp.dtype(out_dtype)

    # (B,1)/(B,) -> (1,B) is a pure metadata reshape of contiguous data.
    x_lane = x.astype(jnp.float32).reshape(1, B)
    freqs_f32 = freqs.astype(jnp.float32)
    freqs2 = jnp.concatenate([freqs_f32, freqs_f32]).reshape(2 * F, 1)
    phase = jnp.concatenate(
        [jnp.zeros((F,), jnp.float32), jnp.full((F,), -0.5 * math.pi, jnp.float32)]
    ).reshape(2 * F, 1)

    tb = _choose_batch_tile(B, R)
    grid = (pl.cdiv(B, tb),)

    kern = functools.partial(_pos_emb_kernel, include_x=include_original)

    out_t = pl.pallas_call(
        kern,
        out_shape=jax.ShapeDtypeStruct((R, B), out_dtype),
        grid=grid,
        in_specs=[
            pl.BlockSpec((1, tb), lambda i: (0, i)),      # x: tiled over batch lanes
            pl.BlockSpec((2 * F, 1), lambda i: (0, 0)),   # freqs2: resident block
            pl.BlockSpec((2 * F, 1), lambda i: (0, 0)),   # phase:  resident block
        ],
        out_specs=pl.BlockSpec((R, tb), lambda i: (0, i)),
        # TODO(synk): if profiling many-step grids shows exposed output DMA, add
        # pipeline_mode=pl.Buffered(3) on out_specs (the tile budget leaves room).
        compiler_params=pltpu.CompilerParams(
            dimension_semantics=("parallel",),            # megacore sharding on v7x
            vmem_limit_bytes=32 << 20,
        ),
        cost_estimate=pl.CostEstimate(
            flops=4 * B * F,
            transcendentals=2 * B * F,
            bytes_accessed=4 * B + 16 * F + R * B * out_dtype.itemsize,
        ),
    )(x_lane, freqs2, phase)

    if transposed_output:
        return out_t                                      # kernel-native (R, B)
    return out_t.T                                        # torch contract (B, R)


# ---------------------------------------------------------------------------
# Module-equivalent wrapper
# ---------------------------------------------------------------------------
class PositionalEmbedding:
    def __init__(self, L: int = 10, mode: str = "lin"):
        self.L = L
        self.mode = mode
        if mode == "poslin":
            self.freqs = get_freqs_poslin(L)
        elif mode == "power":
            self.freqs = get_freqs_power_ls(L)
        elif mode == "power_nls":
            self.freqs = get_freqs_power_nls(L)
        elif mode == "lin":
            self.freqs = get_freq_linear(L)
        elif mode == "normal":
            self.freqs = get_freq_gaussian(L)
        else:
            raise Exception("unknown harmonic mode")

    def __call__(self, X, include_original: bool = False, *,
                 out_dtype=jnp.float32, transposed_output: bool = False):
        return positional_embedding_pallas(
            X, self.freqs, include_original,
            out_dtype=out_dtype, transposed_output=transposed_output,
        )


# ---------------------------------------------------------------------------
# Main
# ---------------------------------------------------------------------------
if __name__ == "__main__":
    key = jax.random.PRNGKey(0)
    B, L = 8, 10                      # batch=8, L=10 -> F=5, output width 10
    X = jax.random.normal(key, (B, 1), dtype=jnp.float32)

    emb = PositionalEmbedding(L=L, mode="lin")

    out = jax.block_until_ready(emb(X, include_original=False))

    # reference (plain JAX)
    args = X.astype(jnp.float32) * emb.freqs[None, :]
    ref = jnp.concatenate([jnp.cos(args), jnp.sin(args)], axis=-1)
    assert out.shape == (B, L)
    assert jnp.allclose(out, ref, atol=1e-5, rtol=1e-5), "mismatch vs reference"

    out_inc = jax.block_until_ready(emb(X, include_original=True))
    ref_inc = jnp.concatenate([X, ref], axis=-1)
    assert out_inc.shape == (B, L + 1)
    assert jnp.allclose(out_inc, ref_inc, atol=1e-5, rtol=1e-5), \
        "mismatch vs reference (include_original)"

    # kernel-native (R, B) layout: no transpose pass at all
    out_t = jax.block_until_ready(emb(X, transposed_output=True))
    assert out_t.shape == (L, B)
    assert jnp.allclose(out_t, ref.T, atol=1e-5, rtol=1e-5), "mismatch (transposed)"

    # optional bf16 output (halves the dominant HBM store traffic)
    out_bf16 = jax.block_until_ready(emb(X, out_dtype=jnp.bfloat16))
    assert out_bf16.dtype == jnp.bfloat16
    assert jnp.allclose(out_bf16.astype(jnp.float32), ref, atol=2e-2, rtol=2e-2), \
        "mismatch vs reference (bf16)"

    print("KERNEL_OK")
</pallas_src>

<mosaic_0001>
module attributes {stable_mosaic.version = 11 : i64} {
  func.func @_pos_emb_kernel(%arg0: i32, %arg1: memref<1x8xf32, #tpu.memory_space<vmem>>, %arg2: memref<10x1xf32, #tpu.memory_space<vmem>>, %arg3: memref<10x1xf32, #tpu.memory_space<vmem>>, %arg4: memref<10x8xf32, #tpu.memory_space<vmem>>) attributes {dimension_semantics = [#tpu.dimension_semantics<parallel>], iteration_bounds = array<i64: 1>, scalar_prefetch = 0 : i64, scratch_operands = 0 : i64, tpu.core_type = #tpu.core_type<tc>, window_params = [{transform_indices = @transform_0, window_bounds = array<i64: 1, 8>}, {pipeline_mode = #tpu.pipeline_mode<synchronous>, transform_indices = @transform_1, window_bounds = array<i64: 10, 1>}, {pipeline_mode = #tpu.pipeline_mode<synchronous>, transform_indices = @transform_2, window_bounds = array<i64: 10, 1>}, {transform_indices = @transform_3, window_bounds = array<i64: 10, 8>}]} {
    %c0 = arith.constant 0 : index
    %c0_0 = arith.constant 0 : index
    %0 = vector.load %arg1[%c0, %c0_0] : memref<1x8xf32, #tpu.memory_space<vmem>>, vector<1x8xf32>
    %c0_1 = arith.constant 0 : index
    %c0_2 = arith.constant 0 : index
    %1 = vector.load %arg2[%c0_1, %c0_2] : memref<10x1xf32, #tpu.memory_space<vmem>>, vector<10x1xf32>
    %2 = vector.broadcast %1 : vector<10x1xf32> to vector<10x8xf32>
    %3 = vector.broadcast %0 : vector<1x8xf32> to vector<10x8xf32>
    %4 = arith.mulf %2, %3 : vector<10x8xf32>
    %c0_3 = arith.constant 0 : index
    %c0_4 = arith.constant 0 : index
    %5 = vector.load %arg3[%c0_3, %c0_4] : memref<10x1xf32, #tpu.memory_space<vmem>>, vector<10x1xf32>
    %6 = vector.broadcast %5 : vector<10x1xf32> to vector<10x8xf32>
    %7 = arith.addf %4, %6 : vector<10x8xf32>
    %8 = math.cos %7 : vector<10x8xf32>
    %c0_5 = arith.constant 0 : index
    %c0_6 = arith.constant 0 : index
    %9 = vector.load %arg4[%c0_5, %c0_6] : memref<10x8xf32, #tpu.memory_space<vmem>>, vector<10x8xf32>
    tpu.vector_store %arg4[%c0_5, %c0_6], %8 {strides = array<i32>} : memref<10x8xf32, #tpu.memory_space<vmem>>, vector<10x8xf32>,
    return
  }
  func.func @transform_0(%arg0: i32) -> (i32, i32) {
    %c0_i32 = arith.constant 0 : i32
    %c0_i32_0 = arith.constant 0 : i32
    return %c0_i32, %arg0 : i32, i32
  }
  func.func @transform_1(%arg0: i32) -> (i32, i32) {
    %c0_i32 = arith.constant 0 : i32
    %c0_i32_0 = arith.constant 0 : i32
    %c0_i32_1 = arith.constant 0 : i32
    return %c0_i32, %c0_i32_0 : i32, i32
  }
  func.func @transform_2(%arg0: i32) -> (i32, i32) {
    %c0_i32 = arith.constant 0 : i32
    %c0_i32_0 = arith.constant 0 : i32
    %c0_i32_1 = arith.constant 0 : i32
    return %c0_i32, %c0_i32_0 : i32, i32
  }
  func.func @transform_3(%arg0: i32) -> (i32, i32) {
    %c0_i32 = arith.constant 0 : i32
    %c0_i32_0 = arith.constant 0 : i32
    return %c0_i32, %arg0 : i32, i32
  }
}

</mosaic_0001>

<llo_original>
// kernel: tpu_custom_call.1
$region0: #{tpu_custom_call.1}
  #allocation0 [shape = 'u32[]', space=smem, size = 0x4, offset = 0x4, fixed_abs, tag = 'smem constant byte address 0x4 - core index']
  #allocation1 [shape = 'u32[144,128]{1,0:T(1,128)}', space=vmem, size = 0x12000, scoped, tag = 'internal scratch']
  %s0 = inlined_call_operand.vmem [shape: f32[1,8], index: 0, kind: input, shape index: {}]
  %s1 = inlined_call_operand.vmem [shape: f32[10,1], index: 1, kind: input, shape index: {}]
  %s2 = inlined_call_operand.vmem [shape: f32[10,1], index: 2, kind: input, shape index: {}]
  %s3 = inlined_call_operand.vmem [shape: f32[10,8], index: 3, kind: output, shape index: {}]
  %s4 = sld [smem:[#allocation0]]
  $region22: #{tpu_custom_call.1} parent=0
    _
  %s6 = ssub.s32 1, %s4
  %s7 = scalar_select 0, %s6, %s4
  // Predicated region
  $region2: #{tpu_custom_call.1} parent=0 // pred_check
    _
  $region3: #{tpu_custom_call.1} parent=0 // pred_check_branch
    %9 = sbr.rel (0) target = $region5
  $region4: #{tpu_custom_call.1} parent=0 // pred_region
    _
  $region5: #{tpu_custom_call.1} parent=0 // pred_fallthru
    _
  // Predicated region
  $region6: #{tpu_custom_call.1} parent=0 // pred_check
    _
  $region7: #{tpu_custom_call.1} parent=0 // pred_check_branch
    %11 = sbr.rel (0) target = $region9
  $region8: #{tpu_custom_call.1} parent=0 // pred_region
    _
  $region9: #{tpu_custom_call.1} parent=0 // pred_fallthru
    _
  // Predicated region
  $region10: #{tpu_custom_call.1} parent=0 // pred_check
    _
  $region11: #{tpu_custom_call.1} parent=0 // pred_check_branch
    %13 = sbr.rel (0) target = $region13
  $region12: #{tpu_custom_call.1} parent=0 // pred_region
    _
  $region13: #{tpu_custom_call.1} parent=0 // pred_fallthru
    _
  %v14 = vld [vmem:[%s0] sm:$0x1]
  %v15 = vld [vmem:[%s1] sm:$0xff]
  %v16 = vld [vmem:[%s1 + $0x8] sm:$0x3]
  %18 = vset.pattern.permute.xlu0 0
  %19 = vperm.xlu0 %18, %v15
  %v20 = vpop.permute.xlu0 %19
  %23 = vset.pattern.permute.xlu0 0
  %24 = vperm.xlu0 %23, %v16
  %v25 = vpop.permute.xlu0 %24
  %v28 = vlaneseq
  %v29 = vshrl.u32 %v28, 7
  %v30 = vsub.s32 0, %v29
  %v31 = vrot.slane %v14, %v30
  %v33 = vmul.f32 %v20, %v31
  %v34 = vmul.f32 %v25, %v31
  %v35 = vld [vmem:[%s2] sm:$0xff]
  %v36 = vld [vmem:[%s2 + $0x8] sm:$0x3]
  %38 = vset.pattern.permute.xlu0 0
  %39 = vperm.xlu0 %38, %v35
  %v40 = vpop.permute.xlu0 %39
  %43 = vset.pattern.permute.xlu0 0
  %44 = vperm.xlu0 %43, %v36
  %v45 = vpop.permute.xlu0 %44
  %v47 = vadd.f32 %v33, %v40
  %v48 = vadd.f32 %v34, %v45
  %v49 = vand.u32 2147483647, %v47
  %vm50 = vcmp.le.f32.partialorder %v49, 0.7853982
  %vm51 = vcmp.lt.s32.totalorder %v47, 0
  %v52 = vand.u32 %v47, 2139095040
  %v53 = vshrl.u32 %v52, 23
  %v54 = vsub.s32 %v53, 127
  %v55 = vand.u32 2147483647, %v47
  %v56 = vand.u32 %v55, 8388607
  %v57 = vor.u32 %v56, 8388608
  %v58 = vsub.s32 0, %v57
  %v59 = vadd.s32 %v54, 1
  %vm60 = vcmp.gt.s32.totalorder %v59, 0
  %v61 = vsel %vm60, %v59, 0
  %v62 = vshrl.u32 %v61, 5
  %v63 = vand.u32 %v61, 31
  %v64 = vsub.s32 32, %v63
  %v65 = vshrl.u32 683565275, %v64
  %v66 = vshll.u32 683565275, %v63
  %v67 = vshrl.u32 2475754826, %v64
  %v68 = vor.u32 %v66, %v67
  %v69 = vshll.u32 2475754826, %v63
  %v70 = vshrl.u32 2131351028, %v64
  %v71 = vor.u32 %v69, %v70
  %v72 = vshll.u32 2131351028, %v63
  %v73 = vshrl.u32 2102212464, %v64
  %v74 = vor.u32 %v72, %v73
  %v75 = vshll.u32 2102212464, %v63
  %v76 = vshrl.u32 920167782, %v64
  %v77 = vor.u32 %v75, %v76
  %v78 = vshll.u32 920167782, %v63
  %v79 = vshrl.u32 1326507024, %v64
  %v80 = vor.u32 %v78, %v79
  %vm81 = vcmp.lt.s32.totalorder %v62, 1
  %vm82 = vcmp.lt.s32.totalorder %v62, 2
  %vm83 = vcmp.lt.s32.totalorder %v62, 3
  %vm84 = vcmp.lt.s32.totalorder %v62, 4
  %v85 = vsel %vm81, %v65, %v68
  %v86 = vsel %vm84, %v74, 2102212464
  %v87 = vsel %vm83, %v71, %v86
  %v88 = vsel %vm82, %v85, %v87
  %v89 = vsel %vm81, %v68, %v71
  %v90 = vsel %vm84, %v77, 920167782
  %v91 = vsel %vm83, %v74, %v90
  %v92 = vsel %vm82, %v89, %v91
  %v93 = vsel %vm81, %v71, %v74
  %v94 = vsel %vm84, %v80, 1326507024
  %v95 = vsel %vm83, %v77, %v94
  %v96 = vsel %vm82, %v93, %v95
  %v97 = vshll.u32 %v57, 8
  %v98 = vmul.u32.u64.compose %v97, %v96
  %v99 = vextract.low.u32 %v98
  %v100 = vextract.high.u32 %v98
  %v101 = vmul.u32.u64.compose %v97, %v92
  %v102 = vextract.low.u32 %v101
  %v103 = vextract.high.u32 %v101
  %v104 = vmul.u32 %v97, %v88
  %v105 = vadd.s32 %v100, %v102
  %vm106 = vc.u32 %v100, %v102
  %v107 = vadd.s32 %v103, 1
  %v108 = vsel %vm106, %v107, %v103
  %v109 = vadd.s32 %v104, %v108
  %v110 = vadd.s32 %v109, 536870912
  %v111 = vshrl.u32 %v110, 30
  %v112 = vshll.u32 %v111, 30
  %v113 = vsub.s32 %v109, %v112
  %vm114 = vcmp.lt.s32.totalorder %v113, 0
  %v115 = vsub.s32 0, %v113
  %v116 = vsel %vm114, %v115, %v113
  %v117 = vclz %v116
  %v118 = vsub.s32 %v117, 2
  %vm119 = vcmp.gt.s32.totalorder 0, %v118
  %v120 = vsel %vm119, 0, %v118
  %v121 = vsub.s32 32, %v120
  %v122 = vshll.u32 %v113, %v120
  %v123 = vshrl.u32 %v105, %v121
  %v124 = vor.u32 %v122, %v123
  %v125 = vsub.s32 4294967266, %v120
  %v126 = vadd.s32 %v125, 127
  %v127 = vshll.u32 %v126, 23
  %v128 = vor.u32 4788187, %v127
  %v129 = vand.u32 2147483647, %v128
  %v131 = vcvt.s32.f32 %v124
  %v132 = vmul.f32 %v131, %v129
  %v133 = vxor.u32 %v132, 2147483648
  %v134 = vsel %vm51, %v133, %v132
  %v135 = vsub.s32 4, %v111
  %v136 = vsel %vm51, %v135, %v111
  %v137 = vsel %vm50, %v47, %v134
  %v138 = vsel %vm50, 0, %v136
  %v139 = vcosq.f32.pop %v137
  %v140 = vsinq.f32.pop %v137
  %vm141 = vweird.f32 %v47
  %v142 = vand.u32 %v138, 3
  %vm143 = vcmp.lt.s32.totalorder %v142, 2
  %vm144 = vcmp.eq.s32.totalorder %v142, 0
  %v145 = vxor.u32 %v140, 2147483648
  %v146 = vsel %vm144, %v139, %v145
  %vm147 = vcmp.eq.s32.totalorder %v142, 2
  %v148 = vxor.u32 %v139, 2147483648
  %v149 = vsel %vm147, %v148, %v140
  %v150 = vsel %vm143, %v146, %v149
  %v151 = vsel %vm141, nan, %v150
  %v152 = vand.u32 2147483647, %v48
  %vm153 = vcmp.le.f32.partialorder %v152, 0.7853982
  %vm154 = vcmp.lt.s32.totalorder %v48, 0
  %v155 = vand.u32 %v48, 2139095040
  %v156 = vshrl.u32 %v155, 23
  %v157 = vsub.s32 %v156, 127
  %v158 = vand.u32 2147483647, %v48
  %v159 = vand.u32 %v158, 8388607
  %v160 = vor.u32 %v159, 8388608
  %v161 = vsub.s32 0, %v160
  %v162 = vadd.s32 %v157, 1
  %vm163 = vcmp.gt.s32.totalorder %v162, 0
  %v164 = vsel %vm163, %v162, 0
  %v165 = vshrl.u32 %v164, 5
  %v166 = vand.u32 %v164, 31
  %v167 = vsub.s32 32, %v166
  %v168 = vshrl.u32 683565275, %v167
  %v169 = vshll.u32 683565275, %v166
  %v170 = vshrl.u32 2475754826, %v167
  %v171 = vor.u32 %v169, %v170
  %v172 = vshll.u32 2475754826, %v166
  %v173 = vshrl.u32 2131351028, %v167
  %v174 = vor.u32 %v172, %v173
  %v175 = vshll.u32 2131351028, %v166
  %v176 = vshrl.u32 2102212464, %v167
  %v177 = vor.u32 %v175, %v176
  %v178 = vshll.u32 2102212464, %v166
  %v179 = vshrl.u32 920167782, %v167
  %v180 = vor.u32 %v178, %v179
  %v181 = vshll.u32 920167782, %v166
  %v182 = vshrl.u32 1326507024, %v167
  %v183 = vor.u32 %v181, %v182
  %vm184 = vcmp.lt.s32.totalorder %v165, 1
  %vm185 = vcmp.lt.s32.totalorder %v165, 2
  %vm186 = vcmp.lt.s32.totalorder %v165, 3
  %vm187 = vcmp.lt.s32.totalorder %v165, 4
  %v188 = vsel %vm184, %v168, %v171
  %v189 = vsel %vm187, %v177, 2102212464
  %v190 = vsel %vm186, %v174, %v189
  %v191 = vsel %vm185, %v188, %v190
  %v192 = vsel %vm184, %v171, %v174
  %v193 = vsel %vm187, %v180, 920167782
  %v194 = vsel %vm186, %v177, %v193
  %v195 = vsel %vm185, %v192, %v194
  %v196 = vsel %vm184, %v174, %v177
  %v197 = vsel %vm187, %v183, 1326507024
  %v198 = vsel %vm186, %v180, %v197
  %v199 = vsel %vm185, %v196, %v198
  %v200 = vshll.u32 %v160, 8
  %v201 = vmul.u32.u64.compose %v200, %v199
  %v202 = vextract.low.u32 %v201
  %v203 = vextract.high.u32 %v201
  %v204 = vmul.u32.u64.compose %v200, %v195
  %v205 = vextract.low.u32 %v204
  %v206 = vextract.high.u32 %v204
  %v207 = vmul.u32 %v200, %v191
  %v208 = vadd.s32 %v203, %v205
  %vm209 = vc.u32 %v203, %v205
  %v210 = vadd.s32 %v206, 1
  %v211 = vsel %vm209, %v210, %v206
  %v212 = vadd.s32 %v207, %v211
  %v213 = vadd.s32 %v212, 536870912
  %v214 = vshrl.u32 %v213, 30
  %v215 = vshll.u32 %v214, 30
  %v216 = vsub.s32 %v212, %v215
  %vm217 = vcmp.lt.s32.totalorder %v216, 0
  %v218 = vsub.s32 0, %v216
  %v219 = vsel %vm217, %v218, %v216
  %v220 = vclz %v219
  %v221 = vsub.s32 %v220, 2
  %vm222 = vcmp.gt.s32.totalorder 0, %v221
  %v223 = vsel %vm222, 0, %v221
  %v224 = vsub.s32 32, %v223
  %v225 = vshll.u32 %v216, %v223
  %v226 = vshrl.u32 %v208, %v224
  %v227 = vor.u32 %v225, %v226
  %v228 = vsub.s32 4294967266, %v223
  %v229 = vadd.s32 %v228, 127
  %v230 = vshll.u32 %v229, 23
  %v231 = vor.u32 4788187, %v230
  %v232 = vand.u32 2147483647, %v231
  %v234 = vcvt.s32.f32 %v227
  %v235 = vmul.f32 %v234, %v232
  %v236 = vxor.u32 %v235, 2147483648
  %v237 = vsel %vm154, %v236, %v235
  %v238 = vsub.s32 4, %v214
  %v239 = vsel %vm154, %v238, %v214
  %v240 = vsel %vm153, %v48, %v237
  %v241 = vsel %vm153, 0, %v239
  %v242 = vcosq.f32.pop %v240
  %v243 = vsinq.f32.pop %v240
  %vm244 = vweird.f32 %v48
  %v245 = vand.u32 %v241, 3
  %vm246 = vcmp.lt.s32.totalorder %v245, 2
  %vm247 = vcmp.eq.s32.totalorder %v245, 0
  %v248 = vxor.u32 %v243, 2147483648
  %v249 = vsel %vm247, %v242, %v248
  %vm250 = vcmp.eq.s32.totalorder %v245, 2
  %v251 = vxor.u32 %v242, 2147483648
  %v252 = vsel %vm250, %v251, %v243
  %v253 = vsel %vm246, %v249, %v252
  %v254 = vsel %vm244, nan, %v253
  %vm255 = vcmask 64512
  %256 = vst.msk [vmem:[%s3] sm:$0xff] %vm255, %v151
  %vm257 = vcmask 58368
  %258 = vst.msk [vmem:[%s3 + $0x8] sm:$0x3] %vm257, %v254
  // Predicated region
  $region14: #{tpu_custom_call.1} parent=0 // pred_check
    _
  $region15: #{tpu_custom_call.1} parent=0 // pred_check_branch
    %260 = sbr.rel (0) target = $region17
  $region16: #{tpu_custom_call.1} parent=0 // pred_region
    _
  $region17: #{tpu_custom_call.1} parent=0 // pred_fallthru
    _
  // Predicated region
  $region18: #{tpu_custom_call.1} parent=0 // pred_check
    _
  $region19: #{tpu_custom_call.1} parent=0 // pred_check_branch
    %262 = sbr.rel (0) target = $region21
  $region20: #{tpu_custom_call.1} parent=0 // pred_region
    _
  $region21: #{tpu_custom_call.1} parent=0 // pred_fallthru
    _

</llo_original>
